<compile_context>
chip_gen: v7x
topology: tpu7x:2x2x1
jax: 0.10.0
libtpu: 0.0.40
codegen_flags: <defaults>
</compile_context>

<pallas_src>
import math

import jax
import jax.numpy as jnp
from jax.experimental import pallas as pl
from jax.experimental.pallas import tpu as pltpu


# --------------------------------------------------------------------------
# Kernel
# --------------------------------------------------------------------------
def _pointwise_linear_kernel(x_ref, w_ref, b_ref, o_ref):
    # y = weight * x + bias ; the (1, tile_n) weight/bias block broadcasts over
    # the tile_b batch rows of this block.
    o_ref[...] = w_ref[...] * x_ref[...] + b_ref[...]
    # TODO(synk): nn.Dropout(p=0.2) is identity in eval mode; training-mode
    # dropout (pltpu.prng_seed + prng_random_bits mask + 1/(1-p) scale) would
    # be fused here rather than run as a second HBM pass.


# --------------------------------------------------------------------------
# Tiling helpers
# --------------------------------------------------------------------------
def _round_up(x, m):
    return ((x + m - 1) // m) * m


def _block_target_bytes():
    """~2 MiB blocks everywhere; ~4 MiB on v7x (faster HBM, same ~600-cycle
    per-grid-step overhead, so bigger blocks keep the DMA engine saturated)."""
    try:
        kind = jax.devices()[0].device_kind.lower()
    except Exception:
        kind = ""
    if "v7" in kind:
        return 4 * 1024 * 1024
    return 2 * 1024 * 1024


def _choose_tiles(B, N, itemsize, target_bytes):
    """Pick (tile_b, tile_n): tile_n a multiple of 128 (lane-dense, unmasked
    stores), tile_b a multiple of the packed-sublane count for the dtype, and
    block bytes ~= target_bytes. Works with a cdiv grid, so the tiles never
    need to divide B or N exactly."""
    sub = {1: 32, 2: 16}.get(itemsize, 8)  # packed sublane rows per dtype
    target_elems = max(target_bytes // itemsize, sub * 128)
    n_pad = _round_up(N, 128)
    b_pad = _round_up(B, sub)

    if sub * n_pad <= target_elems:
        # Full-N blocks (weight/bias become a single resident slab per N-tile);
        # split the batch to fill the byte budget.
        tile_n = n_pad
        tile_b = min(b_pad, max(sub, (target_elems // tile_n) // sub * sub))
    else:
        # N alone exceeds the budget: minimal sublane group of rows, split N.
        tile_b = sub
        tile_n = min(n_pad, max(128, (target_elems // tile_b) // 128 * 128))

    # Megacore: if the whole (padded) array fits in a single large block, split
    # an axis so both v7x TensorCores get work under "parallel" semantics.
    grid_n = -(-N // tile_n)
    grid_b = -(-B // tile_b)
    if grid_n * grid_b == 1 and tile_b * tile_n * itemsize >= (1 << 20):
        if tile_b >= 2 * sub:
            tile_b = _round_up(-(-tile_b // 2), sub)
        elif tile_n >= 256:
            tile_n = _round_up(-(-tile_n // 2), 128)
    return tile_b, tile_n


# --------------------------------------------------------------------------
# Wrapper
# --------------------------------------------------------------------------
def fixed_input_neuron_pool_forward(inputs, weight, bias, embeddings):
    """inputs: (B, N); weight, bias: (N,); embeddings: (N, E)."""
    B, N = inputs.shape
    itemsize = jnp.dtype(inputs.dtype).itemsize
    tile_b, tile_n = _choose_tiles(B, N, itemsize, _block_target_bytes())

    w2 = weight.reshape(1, N)
    b2 = bias.reshape(1, N)

    # Grid: N tiles outermost, batch tiles innermost. The weight/bias block
    # index depends only on the N-tile index, so those (1, tile_n) slabs stay
    # resident across the inner batch loop. Both axes are independent ->
    # "parallel" (megacore sharding on v7x). The cdiv grid + Pallas edge-block
    # masking handles non-multiple B / N without inflating any block.
    grid = (pl.cdiv(N, tile_n), pl.cdiv(B, tile_b))

    transformed = pl.pallas_call(
        _pointwise_linear_kernel,
        out_shape=jax.ShapeDtypeStruct((B, N), inputs.dtype),
        grid_spec=pltpu.PrefetchScalarGridSpec(
            num_scalar_prefetch=0,
            grid=grid,
            in_specs=[
                pl.BlockSpec((tile_b, tile_n), lambda j, i: (i, j)),
                pl.BlockSpec((1, tile_n), lambda j, i: (0, j)),
                pl.BlockSpec((1, tile_n), lambda j, i: (0, j)),
            ],
            out_specs=pl.BlockSpec((tile_b, tile_n), lambda j, i: (i, j)),
        ),
        compiler_params=pltpu.CompilerParams(
            dimension_semantics=("parallel", "parallel"),
        ),
    )(inputs, w2, b2)

    # `input_axon_embeddings + 0.0` is a no-op copy of an immutable JAX array;
    # returning it unchanged avoids a full N*E HBM read+write. (Only visible
    # difference vs. PyTorch: -0.0 entries would have become +0.0.)
    return transformed, embeddings


# --------------------------------------------------------------------------
# Deterministic parameter init (mirrors the PyTorch __init__)
# --------------------------------------------------------------------------
def init_params(key, n_neurons, embedding_dim, dtype=jnp.float32):
    k_w, k_e = jax.random.split(key, 2)
    # PointwiseLinearLayer: weight ~ U(-1, 1), bias = 0
    weight = jax.random.uniform(
        k_w, (n_neurons,), dtype=dtype, minval=-1.0, maxval=1.0
    )
    bias = jnp.zeros((n_neurons,), dtype=dtype)
    # kaiming_uniform_(mode='fan_out') on (n_neurons, embedding_dim):
    #   fan_out = n_neurons, gain = sqrt(2), bound = sqrt(3)*gain/sqrt(fan_out)
    bound = math.sqrt(6.0 / n_neurons)
    embeddings = jax.random.uniform(
        k_e, (n_neurons, embedding_dim), dtype=dtype, minval=-bound, maxval=bound
    )
    return weight, bias, embeddings


def _check(batch, n_neurons, embedding_dim, key):
    k_in, k_p = jax.random.split(key)
    inputs = jax.random.normal(k_in, (batch, n_neurons), dtype=jnp.float32)
    weight, bias, embeddings = init_params(k_p, n_neurons, embedding_dim)

    out_inputs, out_emb = fixed_input_neuron_pool_forward(
        inputs, weight, bias, embeddings
    )
    jax.block_until_ready((out_inputs, out_emb))

    ref_inputs = weight[None, :] * inputs + bias[None, :]
    assert out_inputs.shape == (batch, n_neurons)
    assert jnp.allclose(out_inputs, ref_inputs, atol=1e-6)
    assert jnp.array_equal(out_emb, embeddings)


if __name__ == "__main__":
    key = jax.random.PRNGKey(0)
    k0, k1 = jax.random.split(key)

    # Nominal small shapes.
    _check(batch=8, n_neurons=256, embedding_dim=32, key=k0)
    # Non-(8,128)-multiple shapes exercise the cdiv grid / edge-block masking.
    _check(batch=5, n_neurons=200, embedding_dim=16, key=k1)

    print("KERNEL_OK")
</pallas_src>

<mosaic_0001>
module attributes {stable_mosaic.version = 11 : i64} {
  func.func @_pointwise_linear_kernel(%arg0: i32, %arg1: i32, %arg2: memref<8x256xf32, #tpu.memory_space<vmem>>, %arg3: memref<1x256xf32, #tpu.memory_space<vmem>>, %arg4: memref<1x256xf32, #tpu.memory_space<vmem>>, %arg5: memref<8x256xf32, #tpu.memory_space<vmem>>) attributes {dimension_semantics = [#tpu.dimension_semantics<parallel>, #tpu.dimension_semantics<parallel>], iteration_bounds = array<i64: 1, 1>, scalar_prefetch = 0 : i64, scratch_operands = 0 : i64, tpu.core_type = #tpu.core_type<tc>, window_params = [{transform_indices = @transform_0, window_bounds = array<i64: 8, 256>}, {transform_indices = @transform_1, window_bounds = array<i64: 1, 256>}, {transform_indices = @transform_2, window_bounds = array<i64: 1, 256>}, {transform_indices = @transform_3, window_bounds = array<i64: 8, 256>}]} {
    %c0 = arith.constant 0 : index
    %c0_0 = arith.constant 0 : index
    %0 = vector.load %arg3[%c0, %c0_0] : memref<1x256xf32, #tpu.memory_space<vmem>>, vector<1x256xf32>
    %c0_1 = arith.constant 0 : index
    %c0_2 = arith.constant 0 : index
    %1 = vector.load %arg2[%c0_1, %c0_2] : memref<8x256xf32, #tpu.memory_space<vmem>>, vector<8x256xf32>
    %2 = vector.broadcast %0 : vector<1x256xf32> to vector<8x256xf32>
    %3 = arith.mulf %2, %1 : vector<8x256xf32>
    %c0_3 = arith.constant 0 : index
    %c0_4 = arith.constant 0 : index
    %4 = vector.load %arg4[%c0_3, %c0_4] : memref<1x256xf32, #tpu.memory_space<vmem>>, vector<1x256xf32>
    %5 = vector.broadcast %4 : vector<1x256xf32> to vector<8x256xf32>
    %6 = arith.addf %3, %5 : vector<8x256xf32>
    %c0_5 = arith.constant 0 : index
    %c0_6 = arith.constant 0 : index
    %7 = vector.load %arg5[%c0_5, %c0_6] : memref<8x256xf32, #tpu.memory_space<vmem>>, vector<8x256xf32>
    tpu.vector_store %arg5[%c0_5, %c0_6], %6 {strides = array<i32>} : memref<8x256xf32, #tpu.memory_space<vmem>>, vector<8x256xf32>,
    return
  }
  func.func @transform_0(%arg0: i32, %arg1: i32) -> (i32, i32) {
    %c0_i32 = arith.constant 0 : i32
    return %arg1, %arg0 : i32, i32
  }
  func.func @transform_1(%arg0: i32, %arg1: i32) -> (i32, i32) {
    %c0_i32 = arith.constant 0 : i32
    %c0_i32_0 = arith.constant 0 : i32
    return %c0_i32, %arg0 : i32, i32
  }
  func.func @transform_2(%arg0: i32, %arg1: i32) -> (i32, i32) {
    %c0_i32 = arith.constant 0 : i32
    %c0_i32_0 = arith.constant 0 : i32
    return %c0_i32, %arg0 : i32, i32
  }
  func.func @transform_3(%arg0: i32, %arg1: i32) -> (i32, i32) {
    %c0_i32 = arith.constant 0 : i32
    return %arg1, %arg0 : i32, i32
  }
}

</mosaic_0001>

<llo_original>
// kernel: tpu_custom_call.1
$region0: #{tpu_custom_call.1}
  #allocation0 [shape = 'u32[]', space=smem, size = 0x4, offset = 0x4, fixed_abs, tag = 'smem constant byte address 0x4 - core index']
  #allocation1 [shape = 'u32[144,128]{1,0:T(1,128)}', space=vmem, size = 0x12000, scoped, tag = 'internal scratch']
  %s0 = inlined_call_operand.hbm [shape: f32[8,256], index: 0, kind: input, shape index: {}]
  %s1 = inlined_call_operand.vmem [shape: f32[1,256], index: 1, kind: input, shape index: {}]
  %s2 = inlined_call_operand.vmem [shape: f32[1,256], index: 2, kind: input, shape index: {}]
  %s3 = inlined_call_operand.hbm [shape: f32[8,256], index: 3, kind: output, shape index: {}]
  %s4 = sld [smem:[#allocation0]]
  $region26: #{tpu_custom_call.1} parent=0
    _
  %s6 = ssub.s32 1, %s4
  %s7 = scalar_select 0, %s6, %s4
  $region1: #{tpu_custom_call.1} parent=0
    #allocation2 [shape = 'u8[8192]{0}', space=vmem, size = 0x2000, scoped, tag = 'input window, operand 0, single buffered']
    #allocation3 [shape = 's32[1]{0}', space=sflag, size = 0x4, scoped, tag = 'scoped memory for tpu_custom_call.1']
    #allocation4 [shape = 's32[1]{0}', space=sflag, size = 0x4, scoped, tag = 'scoped memory for tpu_custom_call.1']
    #allocation5 [shape = 'u8[8192]{0}', space=vmem, size = 0x2000, scoped, tag = 'output window, operand 0, single buffered']
    %8 = vsyncpa [#allocation3], 0
    %9 = vsyncpa [#allocation4], 0
    // Predicated region
    $region2: #{tpu_custom_call.1} parent=1 // pred_check
      _
    $region3: #{tpu_custom_call.1} parent=1 // pred_check_branch
      %11 = sbr.rel (0) target = $region5
    $region4: #{tpu_custom_call.1} parent=1 // pred_region
      %s13 = ssub.s32 256, 256
      %14 = vsyncadd [#allocation3], %s13
      %s16 = sshll.u32 [#allocation2], 4
      %s17 = int_to_ptr.vmem [resolvable:$true] %s16
      %19 = dma.hbm_to_vmem [thread:$0]  %s0, 256, %s17, [#allocation3]
    $region5: #{tpu_custom_call.1} parent=1 // pred_fallthru
      _
    // Predicated region
    $region6: #{tpu_custom_call.1} parent=1 // pred_check
      _
    $region7: #{tpu_custom_call.1} parent=1 // pred_check_branch
      %21 = sbr.rel (0) target = $region9
    $region8: #{tpu_custom_call.1} parent=1 // pred_region
      _
    $region9: #{tpu_custom_call.1} parent=1 // pred_fallthru
      _
    // Predicated region
    $region10: #{tpu_custom_call.1} parent=1 // pred_check
      _
    $region11: #{tpu_custom_call.1} parent=1 // pred_check_branch
      %23 = sbr.rel (0) target = $region13
    $region12: #{tpu_custom_call.1} parent=1 // pred_region
      _
    $region13: #{tpu_custom_call.1} parent=1 // pred_fallthru
      _
    // Predicated region
    $region14: #{tpu_custom_call.1} parent=1 // pred_check
      _
    $region15: #{tpu_custom_call.1} parent=1 // pred_check_branch
      %25 = sbr.rel (0) target = $region17
    $region16: #{tpu_custom_call.1} parent=1 // pred_region
      %26 = dma.done [#allocation3], 256
    $region17: #{tpu_custom_call.1} parent=1 // pred_fallthru
      _
    %v27 = vld [vmem:[%s1] sm:$0x3]
    %v28 = vld [vmem:[#allocation2] sm:$0xff]
    %v29 = vld [vmem:[#allocation2 + $0x8] sm:$0xff]
    %v31 = vlaneseq
    %v32 = vshrl.u32 %v31, 7
    %v33 = vsub.s32 0, %v32
    %v34 = vrot.slane %v27, %v33
    %v35 = vlaneseq
    %v36 = vshrl.u32 %v35, 7
    %v37 = vsub.s32 1, %v36
    %v38 = vrot.slane %v27, %v37
    %v41 = vmul.f32 %v34, %v28
    %v42 = vmul.f32 %v38, %v29
    %v43 = vld [vmem:[%s2] sm:$0x3]
    %v45 = vlaneseq
    %v46 = vshrl.u32 %v45, 7
    %v47 = vsub.s32 0, %v46
    %v48 = vrot.slane %v43, %v47
    %v49 = vlaneseq
    %v50 = vshrl.u32 %v49, 7
    %v51 = vsub.s32 1, %v50
    %v52 = vrot.slane %v43, %v51
    %v55 = vadd.f32 %v41, %v48
    %v56 = vadd.f32 %v42, %v52
    %57 = vst [vmem:[#allocation5] sm:$0xff] %v55
    %58 = vst [vmem:[#allocation5 + $0x8] sm:$0xff] %v56
    // Predicated region
    $region18: #{tpu_custom_call.1} parent=1 // pred_check
      _
    $region19: #{tpu_custom_call.1} parent=1 // pred_check_branch
      %60 = sbr.rel (0) target = $region21
    $region20: #{tpu_custom_call.1} parent=1 // pred_region
      %s62 = ssub.s32 256, 256
      %63 = vsyncadd [#allocation4], %s62
      %s65 = sshll.u32 [#allocation5], 4
      %s66 = int_to_ptr.vmem [resolvable:$true] %s65
      %68 = dma.vmem_to_hbm [thread:$0]  %s66, 256, %s3, [#allocation4]
    $region21: #{tpu_custom_call.1} parent=1 // pred_fallthru
      _
    // Predicated region
    $region22: #{tpu_custom_call.1} parent=1 // pred_check
      _
    $region23: #{tpu_custom_call.1} parent=1 // pred_check_branch
      %70 = sbr.rel (0) target = $region25
    $region24: #{tpu_custom_call.1} parent=1 // pred_region
      %71 = dma.done [#allocation4], 256
    $region25: #{tpu_custom_call.1} parent=1 // pred_fallthru
      _
    %72 = vsyncpa [#allocation3], 1
    %73 = vsyncpa [#allocation4], 1

</llo_original>
